<compile_context>
chip_gen: v5e
topology: v5e:2x2
jax: 0.10.0
libtpu: 0.0.40
codegen_flags: <defaults>
</compile_context>

<pallas_src>
import numpy as np
import jax
import jax.numpy as jnp
from jax import lax
from jax.experimental import pallas as pl
from jax.experimental.pallas import tpu as pltpu


def _round_up(n, m):
    return ((n + m - 1) // m) * m


# Keep the resident block-table comfortably inside v7x's 32 MiB scoped VMEM
# (v7x has 64 MiB physical — half of v5e/v6e), leaving room for I/O tiles.
_RESIDENT_TABLE_BYTES_LIMIT = 16 * 1024 * 1024


# ---------------------------------------------------------------------------
# Primary kernel: fused multi-hot x block-structured-table matmul.
# ---------------------------------------------------------------------------
def _emb_fused_kernel(rows_ref, tbl_ref, out_ref):
    tb, num_fields = rows_ref.shape
    vpad = tbl_ref.shape[0]

    rows = rows_ref[...]                                    # (TB, F) int32
    col = lax.broadcasted_iota(jnp.int32, (tb, vpad), 1)    # (TB, Vp)

    # Multi-hot mask: one bit per field.  Field row ranges are disjoint, so
    # OR-ing the per-field one-hots is exact.
    hot = col == rows[:, 0:1]
    for f in range(1, num_fields):
        hot = hot | (col == rows[:, f:f + 1])
    multihot = hot.astype(tbl_ref.dtype)                    # (TB, Vp)

    # One MXU call for all F fields: column block f of tbl is the embedding
    # table masked to field f's row range, so block f of the product is
    # exactly emb[rows[:, f]].  precision=HIGHEST keeps the f32 gather exact
    # (a single bf16 pass would round the table); the one-hot operand is
    # exact in bf16 so only the table side needs the extra passes.
    out_ref[...] = jnp.dot(
        multihot, tbl_ref[...],
        preferred_element_type=jnp.float32,
        precision=lax.Precision.HIGHEST,
    ).astype(out_ref.dtype)


# ---------------------------------------------------------------------------
# Large-vocab fallback: per-row DMA gather, table stays in HBM.
# ---------------------------------------------------------------------------
def _row_gather_kernel(rows_ref, tbl_ref, out_ref):
    # rows_ref (scalar prefetch) is consumed by the index_maps only.
    del rows_ref
    out_ref[...] = tbl_ref[...]


def _features_embedding_row_gather(rows, emb_table, B, F, E):
    # VMEM use is O(E) regardless of vocabulary size: each grid step DMAs
    # exactly the one table row it needs (scalar-prefetched row ids drive a
    # pl.Element index_map on the HBM-resident table).
    # TODO(synk): batch multiple rows per step with manual make_async_copy to
    # amortize per-row DMA / grid-step overhead on the large-V path.
    N = B * F
    Np = _round_up(N, 8)
    rows_flat = jnp.pad(rows.reshape(-1), (0, Np - N)).astype(jnp.int32)

    out = pl.pallas_call(
        _row_gather_kernel,
        out_shape=jax.ShapeDtypeStruct((Np, E), emb_table.dtype),
        grid_spec=pltpu.PrefetchScalarGridSpec(
            num_scalar_prefetch=1,
            grid=(Np,),
            in_specs=[
                pl.BlockSpec((pl.Element(1), E), lambda i, r: (r[i], 0)),
            ],
            out_specs=pl.BlockSpec((1, E), lambda i, r: (i, 0)),
        ),
        compiler_params=pltpu.CompilerParams(
            dimension_semantics=("arbitrary",),
        ),
    )(rows_flat, emb_table)
    return out[:N].reshape(B, F, E)


# ---------------------------------------------------------------------------
# Wrapper
# ---------------------------------------------------------------------------
def _choose_batch_tile(B, Cpad, itemsize):
    # >=2 grid steps for mid/large batches so v7x's two TensorCores both get
    # work; tiles up to 2048 rows amortize the ~0.35 us per-grid-step cost.
    if B <= 16:
        tile = _round_up(max(B, 1), 8)
    elif B <= 4096:
        tile = _round_up((B + 1) // 2, 8)          # exactly 2 tiles
    else:
        tile = 2048
    # Keep the double-buffered output tile under ~8 MiB of VMEM.
    max_tile = max(8, ((8 * 1024 * 1024) // (2 * Cpad * itemsize)) // 8 * 8)
    return max(8, min(tile, max_tile))


def _single_buffered_spec(block_shape, index_map):
    # Constant-index operand: one VMEM copy is enough (default double
    # buffering would hold two identical copies of the table).
    try:
        return pl.BlockSpec(block_shape, index_map, pipeline_mode=pl.Buffered(1))
    except TypeError:  # older BlockSpec without pipeline_mode
        return pl.BlockSpec(block_shape, index_map)


def features_embedding(x, offsets, emb_table, *, batch_tile=None):
    """x: (B, F) int; offsets: (F,) int; emb_table: (V, E) float32.
    Returns (B, F, E) float32, identical to the PyTorch module's forward."""
    B, F = x.shape
    V, E = emb_table.shape
    itemsize = emb_table.dtype.itemsize

    # Fold the offset add into the wrapper (fuses with the pad below in XLA).
    rows = x.astype(jnp.int32) + offsets.astype(jnp.int32)[None, :]     # (B, F)

    C = F * E
    Cpad = _round_up(C, 128)            # lane-dense output width (unmasked stores)
    Vp = _round_up(max(V, 8), 128)      # MXU-friendly contraction dim
    table_bytes = Vp * Cpad * itemsize

    # Gate the VMEM-resident strategy on table size (v7x has half the VMEM of
    # v5e/v6e); huge vocabularies take the HBM row-gather path instead.
    if table_bytes > _RESIDENT_TABLE_BYTES_LIMIT:
        return _features_embedding_row_gather(rows, emb_table, B, F, E)

    # Block-structured table: column block f holds the embedding rows in
    # field f's offset range [offsets[f], offsets[f+1]) and zeros elsewhere.
    starts = offsets.astype(jnp.int32)
    ends = jnp.concatenate([starts[1:], jnp.asarray([V], dtype=jnp.int32)])
    v_ids = jnp.arange(Vp, dtype=jnp.int32)
    emb_p = jnp.pad(emb_table, ((0, Vp - V), (0, 0)))                   # (Vp, E)
    blocks = []
    for f in range(F):
        in_f = ((v_ids >= starts[f]) & (v_ids < ends[f])).astype(emb_table.dtype)
        blocks.append(emb_p * in_f[:, None])
    tbl = jnp.concatenate(blocks, axis=1)                               # (Vp, F*E)
    if Cpad > C:
        tbl = jnp.pad(tbl, ((0, 0), (0, Cpad - C)))                     # (Vp, Cpad)

    if batch_tile is None:
        batch_tile = _choose_batch_tile(B, Cpad, itemsize)
    Bp = _round_up(B, batch_tile)
    rows_p = jnp.pad(rows, ((0, Bp - B), (0, 0)))   # padded rows gather row 0, sliced off

    out_flat = pl.pallas_call(
        _emb_fused_kernel,
        out_shape=jax.ShapeDtypeStruct((Bp, Cpad), emb_table.dtype),
        grid_spec=pltpu.PrefetchScalarGridSpec(
            num_scalar_prefetch=0,
            grid=(Bp // batch_tile,),
            in_specs=[
                pl.BlockSpec((batch_tile, F), lambda i: (i, 0)),        # row-id tile
                _single_buffered_spec((Vp, Cpad), lambda i: (0, 0)),    # table, 1 VMEM copy
            ],
            out_specs=pl.BlockSpec((batch_tile, Cpad), lambda i: (i, 0)),
        ),
        compiler_params=pltpu.CompilerParams(
            dimension_semantics=("parallel",),      # shard batch tiles across TCs (v7x)
            vmem_limit_bytes=32 * 1024 * 1024,      # safe on v5e/v6e/v7x for this sizing
        ),
    )(rows_p, tbl)

    return out_flat[:B, :C].reshape(B, F, E)


if __name__ == "__main__":
    # Module hyper-parameters (synthetic, deterministic).
    field_dims = (8, 16, 24, 32)
    F = len(field_dims)
    V = int(sum(field_dims))
    B = 2

    key = jax.random.PRNGKey(0)
    k_emb_a, k_emb_b, k_x = jax.random.split(key, 3)

    offsets = jnp.asarray(np.array((0, *np.cumsum(field_dims)[:-1]), dtype=np.int32))

    # Per-field indices in [0, field_dims[f]) — deterministic from PRNGKey(0).
    x_cols = []
    for fk, fd in zip(jax.random.split(k_x, F), field_dims):
        x_cols.append(jax.random.randint(fk, (B,), 0, fd, dtype=jnp.int32))
    x = jnp.stack(x_cols, axis=1)  # (B, F) int32

    # Two embed dims: F*E == 128 (exactly lane-dense) and F*E == 32 (exercises
    # the pad-to-128 output path).
    for embed_dim, k_emb in ((32, k_emb_a), (8, k_emb_b)):
        # xavier_uniform_ on (V, embed_dim): U(-a, a), a = sqrt(6/(fan_in+fan_out))
        a = float(np.sqrt(6.0 / (V + embed_dim)))
        emb_table = jax.random.uniform(
            k_emb, (V, embed_dim), dtype=jnp.float32, minval=-a, maxval=a)

        out = features_embedding(x, offsets, emb_table)
        out = jax.block_until_ready(out)

        # Pure-JAX reference (same semantics as the PyTorch forward).
        ref_rows = (x + offsets[None, :]).reshape(-1)
        ref = emb_table[ref_rows].reshape(B, F, embed_dim)

        assert out.shape == (B, F, embed_dim)
        assert out.dtype == jnp.float32
        assert jnp.allclose(out, ref, rtol=1e-6, atol=1e-6), (
            f"Pallas gather mismatch vs reference (E={embed_dim})")

    print("KERNEL_OK")
</pallas_src>

<mosaic_0001>
module attributes {stable_mosaic.version = 11 : i64} {
  func.func @_emb_fused_kernel(%arg0: i32, %arg1: memref<8x4xi32, #tpu.memory_space<vmem>>, %arg2: memref<128x128xf32, #tpu.memory_space<vmem>>, %arg3: memref<8x128xf32, #tpu.memory_space<vmem>>) attributes {dimension_semantics = [#tpu.dimension_semantics<parallel>], iteration_bounds = array<i64: 1>, scalar_prefetch = 0 : i64, scratch_operands = 0 : i64, tpu.core_type = #tpu.core_type<tc>, window_params = [{transform_indices = @transform_0, window_bounds = array<i64: 8, 4>}, {pipeline_mode = #tpu.pipeline_mode<synchronous>, transform_indices = @transform_1, window_bounds = array<i64: 128, 128>}, {transform_indices = @transform_2, window_bounds = array<i64: 8, 128>}]} {
    %c0 = arith.constant 0 : index
    %c0_0 = arith.constant 0 : index
    %0 = vector.load %arg1[%c0, %c0_0] : memref<8x4xi32, #tpu.memory_space<vmem>>, vector<8x4xi32>
    %1 = tpu.iota {dimensions = array<i32: 1>} : vector<8x128xi32>
    %2 = vector.extract_strided_slice %0 {offsets = [0, 0], sizes = [8, 1], strides = [1, 1]} : vector<8x4xi32> to vector<8x1xi32>
    %3 = vector.broadcast %2 : vector<8x1xi32> to vector<8x128xi32>
    %4 = arith.cmpi eq, %1, %3 : vector<8x128xi32>
    %5 = vector.extract_strided_slice %0 {offsets = [0, 1], sizes = [8, 1], strides = [1, 1]} : vector<8x4xi32> to vector<8x1xi32>
    %6 = vector.broadcast %5 : vector<8x1xi32> to vector<8x128xi32>
    %7 = arith.cmpi eq, %1, %6 : vector<8x128xi32>
    %8 = arith.ori %4, %7 : vector<8x128xi1>
    %9 = vector.extract_strided_slice %0 {offsets = [0, 2], sizes = [8, 1], strides = [1, 1]} : vector<8x4xi32> to vector<8x1xi32>
    %10 = vector.broadcast %9 : vector<8x1xi32> to vector<8x128xi32>
    %11 = arith.cmpi eq, %1, %10 : vector<8x128xi32>
    %12 = arith.ori %8, %11 : vector<8x128xi1>
    %13 = vector.extract_strided_slice %0 {offsets = [0, 3], sizes = [8, 1], strides = [1, 1]} : vector<8x4xi32> to vector<8x1xi32>
    %14 = vector.broadcast %13 : vector<8x1xi32> to vector<8x128xi32>
    %15 = arith.cmpi eq, %1, %14 : vector<8x128xi32>
    %16 = arith.ori %12, %15 : vector<8x128xi1>
    %17 = arith.extui %16 : vector<8x128xi1> to vector<8x128xi32>
    %18 = arith.sitofp %17 : vector<8x128xi32> to vector<8x128xf32>
    %c0_1 = arith.constant 0 : index
    %c0_2 = arith.constant 0 : index
    %19 = vector.load %arg2[%c0_1, %c0_2] : memref<128x128xf32, #tpu.memory_space<vmem>>, vector<128x128xf32>
    %cst = arith.constant dense<0.000000e+00> : vector<8x128xf32>
    %20 = tpu.matmul %18, %19, %cst {dimension_numbers = #tpu.dot_dimension_numbers<[1], [0], [0], [1], [0, 0, 1, 1], [], []>, precision = #tpu.contract_precision<fp32>} : vector<8x128xf32>, vector<128x128xf32>, vector<8x128xf32> -> vector<8x128xf32>
    %c0_3 = arith.constant 0 : index
    %c0_4 = arith.constant 0 : index
    %21 = vector.load %arg3[%c0_3, %c0_4] : memref<8x128xf32, #tpu.memory_space<vmem>>, vector<8x128xf32>
    tpu.vector_store %arg3[%c0_3, %c0_4], %20 {strides = array<i32>} : memref<8x128xf32, #tpu.memory_space<vmem>>, vector<8x128xf32>,
    return
  }
  func.func @transform_0(%arg0: i32) -> (i32, i32) {
    %c0_i32 = arith.constant 0 : i32
    %c0_i32_0 = arith.constant 0 : i32
    return %arg0, %c0_i32 : i32, i32
  }
  func.func @transform_1(%arg0: i32) -> (i32, i32) {
    %c0_i32 = arith.constant 0 : i32
    %c0_i32_0 = arith.constant 0 : i32
    %c0_i32_1 = arith.constant 0 : i32
    return %c0_i32, %c0_i32_0 : i32, i32
  }
  func.func @transform_2(%arg0: i32) -> (i32, i32) {
    %c0_i32 = arith.constant 0 : i32
    %c0_i32_0 = arith.constant 0 : i32
    return %arg0, %c0_i32 : i32, i32
  }
}

</mosaic_0001>

<llo_original>
// kernel: tpu_custom_call.1
$region0: #{tpu_custom_call.1}
  #allocation0 [shape = 'u32[]', space=smem, size = 0x4, offset = 0x4, fixed_abs, tag = 'smem constant byte address 0x4 - core index']
  #allocation1 [shape = 'u32[72,128]{1,0:T(1,128)}', space=vmem, size = 0x9000, scoped, tag = 'internal scratch']
  %s0 = inlined_call_operand.vmem [shape: s32[8,4], index: 0, kind: input, shape index: {}]
  %s1 = inlined_call_operand.hbm [shape: f32[128,128], index: 1, kind: input, shape index: {}]
  %s2 = inlined_call_operand.hbm [shape: f32[8,128], index: 2, kind: output, shape index: {}]
  %s3 = sld [smem:[#allocation0]]
  $region22: #{tpu_custom_call.1} parent=0
    _
  %s5 = ssub.s32 1, %s3
  %s6 = scalar_select 0, %s5, %s3
  $region1: #{tpu_custom_call.1} parent=0
    #allocation2 [shape = 'u8[65536]{0}', space=vmem, size = 0x10000, scoped, tag = 'input window, operand 1, single buffered']
    #allocation3 [shape = 's32[1]{0}', space=sflag, size = 0x4, scoped, tag = 'scoped memory for tpu_custom_call.1']
    #allocation4 [shape = 's32[1]{0}', space=sflag, size = 0x4, scoped, tag = 'scoped memory for tpu_custom_call.1']
    #allocation5 [shape = 'u8[4096]{0}', space=vmem, size = 0x1000, scoped, tag = 'output window, operand 0, single buffered']
    %7 = vsyncpa [#allocation3], 0
    %8 = vsyncpa [#allocation4], 0
    // Predicated region
    $region2: #{tpu_custom_call.1} parent=1 // pred_check
      _
    $region3: #{tpu_custom_call.1} parent=1 // pred_check_branch
      %10 = sbr.rel (0) target = $region5
    $region4: #{tpu_custom_call.1} parent=1 // pred_region
      _
    $region5: #{tpu_custom_call.1} parent=1 // pred_fallthru
      _
    // Predicated region
    $region6: #{tpu_custom_call.1} parent=1 // pred_check
      _
    $region7: #{tpu_custom_call.1} parent=1 // pred_check_branch
      %12 = sbr.rel (0) target = $region9
    $region8: #{tpu_custom_call.1} parent=1 // pred_region
      %14 = vsyncadd [#allocation3], 0
      %s15 = sshll.u32 %s1, 4
      %s16 = int_to_ptr.hbm [resolvable:$true] %s15
      %s17 = sshll.u32 [#allocation2], 4
      %s18 = int_to_ptr.vmem [resolvable:$true] %s17
      %23 = dma.hbm_to_vmem [thread:$0]  %s16, 2048, %s18, [#allocation3], 128, 128, 8
    $region9: #{tpu_custom_call.1} parent=1 // pred_fallthru
      _
    // Predicated region
    $region10: #{tpu_custom_call.1} parent=1 // pred_check
      _
    $region11: #{tpu_custom_call.1} parent=1 // pred_check_branch
      %25 = sbr.rel (0) target = $region13
    $region12: #{tpu_custom_call.1} parent=1 // pred_region
      %27 = dma.done [#allocation3], 2048
    $region13: #{tpu_custom_call.1} parent=1 // pred_fallthru
      _
    %v28 = vld [vmem:[%s0] sm:$0xff]
    %v29 = vlaneseq
    %v30 = vand.u32 %v29, 127
    %31 = vset.pattern.permute.xlu0 0
    %32 = vperm.xlu0 %31, %v28
    %v33 = vpop.permute.xlu0 %32
    %vm34 = vcmp.eq.s32.totalorder %v30, %v33
    %35 = vset.pattern.permute.xlu0 1
    %36 = vperm.xlu0 %35, %v28
    %v37 = vpop.permute.xlu0 %36
    %vm38 = vcmp.eq.s32.totalorder %v30, %v37
    %vm39 = vmor %vm34, %vm38
    %40 = vset.pattern.permute.xlu0 2
    %41 = vperm.xlu0 %40, %v28
    %v42 = vpop.permute.xlu0 %41
    %vm43 = vcmp.eq.s32.totalorder %v30, %v42
    %vm44 = vmor %vm39, %vm43
    %45 = vset.pattern.permute.xlu0 3
    %46 = vperm.xlu0 %45, %v28
    %v47 = vpop.permute.xlu0 %46
    %vm48 = vcmp.eq.s32.totalorder %v30, %v47
    %vm49 = vmor %vm44, %vm48
    %v50 = vsel %vm49, 1, 0
    %v51 = vcvt.s32.f32 %v50
    %v52 = vld [vmem:[#allocation2] sm:$0xff]
    %v53 = vld [vmem:[#allocation2 + $0x8] sm:$0xff]
    %v54 = vld [vmem:[#allocation2 + $0x10] sm:$0xff]
    %v55 = vld [vmem:[#allocation2 + $0x18] sm:$0xff]
    %v56 = vld [vmem:[#allocation2 + $0x20] sm:$0xff]
    %v57 = vld [vmem:[#allocation2 + $0x28] sm:$0xff]
    %v58 = vld [vmem:[#allocation2 + $0x30] sm:$0xff]
    %v59 = vld [vmem:[#allocation2 + $0x38] sm:$0xff]
    %v60 = vld [vmem:[#allocation2 + $0x40] sm:$0xff]
    %v61 = vld [vmem:[#allocation2 + $0x48] sm:$0xff]
    %v62 = vld [vmem:[#allocation2 + $0x50] sm:$0xff]
    %v63 = vld [vmem:[#allocation2 + $0x58] sm:$0xff]
    %v64 = vld [vmem:[#allocation2 + $0x60] sm:$0xff]
    %v65 = vld [vmem:[#allocation2 + $0x68] sm:$0xff]
    %v66 = vld [vmem:[#allocation2 + $0x70] sm:$0xff]
    %v67 = vld [vmem:[#allocation2 + $0x78] sm:$0xff]
    %v68 = vand.u32 %v67, 4294901760
    %69 = vmatpush.msra.mxu0 %v68
    %v70 = vand.u32 %v66, 4294901760
    %71 = vmatpush.msra.mxu0 %v70
    %v72 = vand.u32 %v65, 4294901760
    %73 = vmatpush.msra.mxu0 %v72
    %v74 = vand.u32 %v64, 4294901760
    %75 = vmatpush.msra.mxu0 %v74
    %v76 = vand.u32 %v63, 4294901760
    %77 = vmatpush.msra.mxu0 %v76
    %v78 = vand.u32 %v62, 4294901760
    %79 = vmatpush.msra.mxu0 %v78
    %v80 = vand.u32 %v61, 4294901760
    %81 = vmatpush.msra.mxu0 %v80
    %v82 = vand.u32 %v60, 4294901760
    %83 = vmatpush.msra.mxu0 %v82
    %v84 = vand.u32 %v59, 4294901760
    %85 = vmatpush.msra.mxu0 %v84
    %v86 = vand.u32 %v58, 4294901760
    %87 = vmatpush.msra.mxu0 %v86
    %v88 = vand.u32 %v57, 4294901760
    %89 = vmatpush.msra.mxu0 %v88
    %v90 = vand.u32 %v56, 4294901760
    %91 = vmatpush.msra.mxu0 %v90
    %v92 = vand.u32 %v55, 4294901760
    %93 = vmatpush.msra.mxu0 %v92
    %v94 = vand.u32 %v54, 4294901760
    %95 = vmatpush.msra.mxu0 %v94
    %v96 = vand.u32 %v53, 4294901760
    %97 = vmatpush.msra.mxu0 %v96
    %v98 = vand.u32 %v52, 4294901760
    %99 = vmatpush.msra.mxu0 %v98
    %v100 = vand.u32 %v51, 4294901760
    %v101 = vsub.f32 %v51, %v100
    %v102 = vand.u32 %v101, 4294901760
    %v103 = vsub.f32 %v101, %v102
    %v104 = vand.u32 %v103, 4294901760
    %105 = vmatmul.f32.gmra.mxu0 %v104
    %v106 = vpop.f32.mrf.mxu0
    %v107 = vadd.f32 0.0, %v106
    %108 = vdwg.mxu0
    %v109 = vand.u32 %v67, 4294901760
    %v110 = vsub.f32 %v67, %v109
    %v111 = vand.u32 %v110, 4294901760
    %v112 = vsub.f32 %v110, %v111
    %v113 = vand.u32 %v112, 4294901760
    %114 = vmatpush.msra.mxu0 %v113
    %v115 = vand.u32 %v66, 4294901760
    %v116 = vsub.f32 %v66, %v115
    %v117 = vand.u32 %v116, 4294901760
    %v118 = vsub.f32 %v116, %v117
    %v119 = vand.u32 %v118, 4294901760
    %120 = vmatpush.msra.mxu0 %v119
    %v121 = vand.u32 %v65, 4294901760
    %v122 = vsub.f32 %v65, %v121
    %v123 = vand.u32 %v122, 4294901760
    %v124 = vsub.f32 %v122, %v123
    %v125 = vand.u32 %v124, 4294901760
    %126 = vmatpush.msra.mxu0 %v125
    %v127 = vand.u32 %v64, 4294901760
    %v128 = vsub.f32 %v64, %v127
    %v129 = vand.u32 %v128, 4294901760
    %v130 = vsub.f32 %v128, %v129
    %v131 = vand.u32 %v130, 4294901760
    %132 = vmatpush.msra.mxu0 %v131
    %v133 = vand.u32 %v63, 4294901760
    %v134 = vsub.f32 %v63, %v133
    %v135 = vand.u32 %v134, 4294901760
    %v136 = vsub.f32 %v134, %v135
    %v137 = vand.u32 %v136, 4294901760
    %138 = vmatpush.msra.mxu0 %v137
    %v139 = vand.u32 %v62, 4294901760
    %v140 = vsub.f32 %v62, %v139
    %v141 = vand.u32 %v140, 4294901760
    %v142 = vsub.f32 %v140, %v141
    %v143 = vand.u32 %v142, 4294901760
    %144 = vmatpush.msra.mxu0 %v143
    %v145 = vand.u32 %v61, 4294901760
    %v146 = vsub.f32 %v61, %v145
    %v147 = vand.u32 %v146, 4294901760
    %v148 = vsub.f32 %v146, %v147
    %v149 = vand.u32 %v148, 4294901760
    %150 = vmatpush.msra.mxu0 %v149
    %v151 = vand.u32 %v60, 4294901760
    %v152 = vsub.f32 %v60, %v151
    %v153 = vand.u32 %v152, 4294901760
    %v154 = vsub.f32 %v152, %v153
    %v155 = vand.u32 %v154, 4294901760
    %156 = vmatpush.msra.mxu0 %v155
    %v157 = vand.u32 %v59, 4294901760
    %v158 = vsub.f32 %v59, %v157
    %v159 = vand.u32 %v158, 4294901760
    %v160 = vsub.f32 %v158, %v159
    %v161 = vand.u32 %v160, 4294901760
    %162 = vmatpush.msra.mxu0 %v161
    %v163 = vand.u32 %v58, 4294901760
    %v164 = vsub.f32 %v58, %v163
    %v165 = vand.u32 %v164, 4294901760
    %v166 = vsub.f32 %v164, %v165
    %v167 = vand.u32 %v166, 4294901760
    %168 = vmatpush.msra.mxu0 %v167
    %v169 = vand.u32 %v57, 4294901760
    %v170 = vsub.f32 %v57, %v169
    %v171 = vand.u32 %v170, 4294901760
    %v172 = vsub.f32 %v170, %v171
    %v173 = vand.u32 %v172, 4294901760
    %174 = vmatpush.msra.mxu0 %v173
    %v175 = vand.u32 %v56, 4294901760
    %v176 = vsub.f32 %v56, %v175
    %v177 = vand.u32 %v176, 4294901760
    %v178 = vsub.f32 %v176, %v177
    %v179 = vand.u32 %v178, 4294901760
    %180 = vmatpush.msra.mxu0 %v179
    %v181 = vand.u32 %v55, 4294901760
    %v182 = vsub.f32 %v55, %v181
    %v183 = vand.u32 %v182, 4294901760
    %v184 = vsub.f32 %v182, %v183
    %v185 = vand.u32 %v184, 4294901760
    %186 = vmatpush.msra.mxu0 %v185
    %v187 = vand.u32 %v54, 4294901760
    %v188 = vsub.f32 %v54, %v187
    %v189 = vand.u32 %v188, 4294901760
    %v190 = vsub.f32 %v188, %v189
    %v191 = vand.u32 %v190, 4294901760
    %192 = vmatpush.msra.mxu0 %v191
    %v193 = vand.u32 %v53, 4294901760
    %v194 = vsub.f32 %v53, %v193
    %v195 = vand.u32 %v194, 4294901760
    %v196 = vsub.f32 %v194, %v195
    %v197 = vand.u32 %v196, 4294901760
    %198 = vmatpush.msra.mxu0 %v197
    %v199 = vand.u32 %v52, 4294901760
    %v200 = vsub.f32 %v52, %v199
    %v201 = vand.u32 %v200, 4294901760
    %v202 = vsub.f32 %v200, %v201
    %v203 = vand.u32 %v202, 4294901760
    %204 = vmatpush.msra.mxu0 %v203
    %v205 = vand.u32 %v51, 4294901760
    %206 = vmatmul.f32.gmra.mxu0 %v205
    %v207 = vpop.f32.mrf.mxu0
    %v208 = vadd.f32 %v107, %v207
    %209 = vdwg.mxu0
    %v210 = vand.u32 %v67, 4294901760
    %v211 = vsub.f32 %v67, %v210
    %212 = vmatpush.msra.mxu0 %v211
    %v213 = vand.u32 %v66, 4294901760
    %v214 = vsub.f32 %v66, %v213
    %215 = vmatpush.msra.mxu0 %v214
    %v216 = vand.u32 %v65, 4294901760
    %v217 = vsub.f32 %v65, %v216
    %218 = vmatpush.msra.mxu0 %v217
    %v219 = vand.u32 %v64, 4294901760
    %v220 = vsub.f32 %v64, %v219
    %221 = vmatpush.msra.mxu0 %v220
    %v222 = vand.u32 %v63, 4294901760
    %v223 = vsub.f32 %v63, %v222
    %224 = vmatpush.msra.mxu0 %v223
    %v225 = vand.u32 %v62, 4294901760
    %v226 = vsub.f32 %v62, %v225
    %227 = vmatpush.msra.mxu0 %v226
    %v228 = vand.u32 %v61, 4294901760
    %v229 = vsub.f32 %v61, %v228
    %230 = vmatpush.msra.mxu0 %v229
    %v231 = vand.u32 %v60, 4294901760
    %v232 = vsub.f32 %v60, %v231
    %233 = vmatpush.msra.mxu0 %v232
    %v234 = vand.u32 %v59, 4294901760
    %v235 = vsub.f32 %v59, %v234
    %236 = vmatpush.msra.mxu0 %v235
    %v237 = vand.u32 %v58, 4294901760
    %v238 = vsub.f32 %v58, %v237
    %239 = vmatpush.msra.mxu0 %v238
    %v240 = vand.u32 %v57, 4294901760
    %v241 = vsub.f32 %v57, %v240
    %242 = vmatpush.msra.mxu0 %v241
    %v243 = vand.u32 %v56, 4294901760
    %v244 = vsub.f32 %v56, %v243
    %245 = vmatpush.msra.mxu0 %v244
    %v246 = vand.u32 %v55, 4294901760
    %v247 = vsub.f32 %v55, %v246
    %248 = vmatpush.msra.mxu0 %v247
    %v249 = vand.u32 %v54, 4294901760
    %v250 = vsub.f32 %v54, %v249
    %251 = vmatpush.msra.mxu0 %v250
    %v252 = vand.u32 %v53, 4294901760
    %v253 = vsub.f32 %v53, %v252
    %254 = vmatpush.msra.mxu0 %v253
    %v255 = vand.u32 %v52, 4294901760
    %v256 = vsub.f32 %v52, %v255
    %257 = vmatpush.msra.mxu0 %v256
    %v258 = vand.u32 %v51, 4294901760
    %v259 = vsub.f32 %v51, %v258
    %260 = vmatmul.f32.gmra.mxu0 %v259
    %v261 = vpop.f32.mrf.mxu0
    %v262 = vadd.f32 %v208, %v261
    %263 = vdwg.mxu0
    %v264 = vand.u32 %v67, 4294901760
    %265 = vmatpush.msra.mxu0 %v264
    %v266 = vand.u32 %v66, 4294901760
    %267 = vmatpush.msra.mxu0 %v266
    %v268 = vand.u32 %v65, 4294901760
    %269 = vmatpush.msra.mxu0 %v268
    %v270 = vand.u32 %v64, 4294901760
    %271 = vmatpush.msra.mxu0 %v270
    %v272 = vand.u32 %v63, 4294901760
    %273 = vmatpush.msra.mxu0 %v272
    %v274 = vand.u32 %v62, 4294901760
    %275 = vmatpush.msra.mxu0 %v274
    %v276 = vand.u32 %v61, 4294901760
    %277 = vmatpush.msra.mxu0 %v276
    %v278 = vand.u32 %v60, 4294901760
    %279 = vmatpush.msra.mxu0 %v278
    %v280 = vand.u32 %v59, 4294901760
    %281 = vmatpush.msra.mxu0 %v280
    %v282 = vand.u32 %v58, 4294901760
    %283 = vmatpush.msra.mxu0 %v282
    %v284 = vand.u32 %v57, 4294901760
    %285 = vmatpush.msra.mxu0 %v284
    %v286 = vand.u32 %v56, 4294901760
    %287 = vmatpush.msra.mxu0 %v286
    %v288 = vand.u32 %v55, 4294901760
    %289 = vmatpush.msra.mxu0 %v288
    %v290 = vand.u32 %v54, 4294901760
    %291 = vmatpush.msra.mxu0 %v290
    %v292 = vand.u32 %v53, 4294901760
    %293 = vmatpush.msra.mxu0 %v292
    %v294 = vand.u32 %v52, 4294901760
    %295 = vmatpush.msra.mxu0 %v294
    %v296 = vand.u32 %v51, 4294901760
    %v297 = vsub.f32 %v51, %v296
    %v298 = vand.u32 %v297, 4294901760
    %299 = vmatmul.f32.gmra.mxu0 %v298
    %v300 = vpop.f32.mrf.mxu0
    %v301 = vadd.f32 %v262, %v300
    %302 = vdwg.mxu0
    %v303 = vand.u32 %v67, 4294901760
    %v304 = vsub.f32 %v67, %v303
    %v305 = vand.u32 %v304, 4294901760
    %306 = vmatpush.msra.mxu0 %v305
    %v307 = vand.u32 %v66, 4294901760
    %v308 = vsub.f32 %v66, %v307
    %v309 = vand.u32 %v308, 4294901760
    %310 = vmatpush.msra.mxu0 %v309
    %v311 = vand.u32 %v65, 4294901760
    %v312 = vsub.f32 %v65, %v311
    %v313 = vand.u32 %v312, 4294901760
    %314 = vmatpush.msra.mxu0 %v313
    %v315 = vand.u32 %v64, 4294901760
    %v316 = vsub.f32 %v64, %v315
    %v317 = vand.u32 %v316, 4294901760
    %318 = vmatpush.msra.mxu0 %v317
    %v319 = vand.u32 %v63, 4294901760
    %v320 = vsub.f32 %v63, %v319
    %v321 = vand.u32 %v320, 4294901760
    %322 = vmatpush.msra.mxu0 %v321
    %v323 = vand.u32 %v62, 4294901760
    %v324 = vsub.f32 %v62, %v323
    %v325 = vand.u32 %v324, 4294901760
    %326 = vmatpush.msra.mxu0 %v325
    %v327 = vand.u32 %v61, 4294901760
    %v328 = vsub.f32 %v61, %v327
    %v329 = vand.u32 %v328, 4294901760
    %330 = vmatpush.msra.mxu0 %v329
    %v331 = vand.u32 %v60, 4294901760
    %v332 = vsub.f32 %v60, %v331
    %v333 = vand.u32 %v332, 4294901760
    %334 = vmatpush.msra.mxu0 %v333
    %v335 = vand.u32 %v59, 4294901760
    %v336 = vsub.f32 %v59, %v335
    %v337 = vand.u32 %v336, 4294901760
    %338 = vmatpush.msra.mxu0 %v337
    %v339 = vand.u32 %v58, 4294901760
    %v340 = vsub.f32 %v58, %v339
    %v341 = vand.u32 %v340, 4294901760
    %342 = vmatpush.msra.mxu0 %v341
    %v343 = vand.u32 %v57, 4294901760
    %v344 = vsub.f32 %v57, %v343
    %v345 = vand.u32 %v344, 4294901760
    %346 = vmatpush.msra.mxu0 %v345
    %v347 = vand.u32 %v56, 4294901760
    %v348 = vsub.f32 %v56, %v347
    %v349 = vand.u32 %v348, 4294901760
    %350 = vmatpush.msra.mxu0 %v349
    %v351 = vand.u32 %v55, 4294901760
    %v352 = vsub.f32 %v55, %v351
    %v353 = vand.u32 %v352, 4294901760
    %354 = vmatpush.msra.mxu0 %v353
    %v355 = vand.u32 %v54, 4294901760
    %v356 = vsub.f32 %v54, %v355
    %v357 = vand.u32 %v356, 4294901760
    %358 = vmatpush.msra.mxu0 %v357
    %v359 = vand.u32 %v53, 4294901760
    %v360 = vsub.f32 %v53, %v359
    %v361 = vand.u32 %v360, 4294901760
    %362 = vmatpush.msra.mxu0 %v361
    %v363 = vand.u32 %v52, 4294901760
    %v364 = vsub.f32 %v52, %v363
    %v365 = vand.u32 %v364, 4294901760
    %366 = vmatpush.msra.mxu0 %v365
    %v367 = vand.u32 %v51, 4294901760
    %368 = vmatmul.f32.gmra.mxu0 %v367
    %v369 = vpop.f32.mrf.mxu0
    %v370 = vadd.f32 %v301, %v369
    %371 = vdwg.mxu0
    %v372 = vand.u32 %v67, 4294901760
    %373 = vmatpush.msra.mxu0 %v372
    %v374 = vand.u32 %v66, 4294901760
    %375 = vmatpush.msra.mxu0 %v374
    %v376 = vand.u32 %v65, 4294901760
    %377 = vmatpush.msra.mxu0 %v376
    %v378 = vand.u32 %v64, 4294901760
    %379 = vmatpush.msra.mxu0 %v378
    %v380 = vand.u32 %v63, 4294901760
    %381 = vmatpush.msra.mxu0 %v380
    %v382 = vand.u32 %v62, 4294901760
    %383 = vmatpush.msra.mxu0 %v382
    %v384 = vand.u32 %v61, 4294901760
    %385 = vmatpush.msra.mxu0 %v384
    %v386 = vand.u32 %v60, 4294901760
    %387 = vmatpush.msra.mxu0 %v386
    %v388 = vand.u32 %v59, 4294901760
    %389 = vmatpush.msra.mxu0 %v388
    %v390 = vand.u32 %v58, 4294901760
    %391 = vmatpush.msra.mxu0 %v390
    %v392 = vand.u32 %v57, 4294901760
    %393 = vmatpush.msra.mxu0 %v392
    %v394 = vand.u32 %v56, 4294901760
    %395 = vmatpush.msra.mxu0 %v394
    %v396 = vand.u32 %v55, 4294901760
    %397 = vmatpush.msra.mxu0 %v396
    %v398 = vand.u32 %v54, 4294901760
    %399 = vmatpush.msra.mxu0 %v398
    %v400 = vand.u32 %v53, 4294901760
    %401 = vmatpush.msra.mxu0 %v400
    %v402 = vand.u32 %v52, 4294901760
    %403 = vmatpush.msra.mxu0 %v402
    %v404 = vand.u32 %v51, 4294901760
    %405 = vmatmul.f32.gmra.mxu0 %v404
    %v406 = vpop.f32.mrf.mxu0
    %v407 = vadd.f32 %v370, %v406
    %408 = vdwg.mxu0
    %409 = vst [vmem:[#allocation5] sm:$0xff] %v407
    // Predicated region
    $region14: #{tpu_custom_call.1} parent=1 // pred_check
      _
    $region15: #{tpu_custom_call.1} parent=1 // pred_check_branch
      %411 = sbr.rel (0) target = $region17
    $region16: #{tpu_custom_call.1} parent=1 // pred_region
      %413 = vsyncadd [#allocation4], 0
      %s415 = sshll.u32 [#allocation5], 4
      %s416 = int_to_ptr.vmem [resolvable:$true] %s415
      %s417 = sshll.u32 %s2, 4
      %s418 = int_to_ptr.hbm [resolvable:$true] %s417
      %420 = dma.vmem_to_hbm [thread:$0]  %s416, 128, %s418, [#allocation4]
    $region17: #{tpu_custom_call.1} parent=1 // pred_fallthru
      _
    // Predicated region
    $region18: #{tpu_custom_call.1} parent=1 // pred_check
      _
    $region19: #{tpu_custom_call.1} parent=1 // pred_check_branch
      %422 = sbr.rel (0) target = $region21
    $region20: #{tpu_custom_call.1} parent=1 // pred_region
      %424 = dma.done [#allocation4], 128
    $region21: #{tpu_custom_call.1} parent=1 // pred_fallthru
      _
    %425 = vsyncpa [#allocation3], 1
    %426 = vsyncpa [#allocation4], 1

</llo_original>
